<compile_context>
chip_gen: v7x
topology: tpu7x:2x2x1
jax: 0.10.0
libtpu: 0.0.40
codegen_flags: <defaults>
</compile_context>

<pallas_src>
import jax
import jax.numpy as jnp
import numpy as np
from jax.experimental import pallas as pl
from jax.experimental.pallas import tpu as pltpu


def _make_boundary_kernel(H, W):
    HW = H * W

    def kernel(x_ref, border_ref, out_ref):
        # x_ref:      (B, H*W) native dtype -- B flattened images (lane-dense)
        # border_ref: (1, H*W) uint8        -- 1 on the image border, 0 interior
        # out_ref:    (B, H*W) uint8        -- 0/1 boundary mask
        x = x_ref[...].astype(jnp.float32)   # in-register upcast (free VPU filler)

        # 3x3 Laplacian via XLU lane rolls on the flattened axis.  Wrap-around
        # taps only hit border pixels, which are unconditionally boundary.
        conv_m = (4.0 * x
                  - pltpu.roll(x, W, axis=1)         # up    neighbour
                  - pltpu.roll(x, HW - W, axis=1)    # down  neighbour
                  - pltpu.roll(x, 1, axis=1)         # left  neighbour
                  - pltpu.roll(x, HW - 1, axis=1))   # right neighbour

        # interior: fore|back == (|conv_m| >= 0.5); border: always True.
        out_ref[...] = ((jnp.abs(conv_m) >= 0.5)
                        | (border_ref[...] != 0)).astype(jnp.uint8)

    return kernel


def _pick_block_images(total, HW, in_itemsize):
    """Images per grid step.

    Targets ~16 MiB of block data (input + u8 output), a multiple of 32 (or 8)
    sublanes for dense packing, and >= ~8 grid steps so v7x megacore can shard
    the 'parallel' axis.  Uses a cdiv grid, so B need not divide the batch.
    """
    bytes_per_img = HW * (in_itemsize + 1)          # native input + u8 output
    b = max(1, (16 << 20) // bytes_per_img)         # per-block VMEM budget
    b = min(b, max(1, pl.cdiv(total, 8)))           # keep the grid >= ~8 steps
    if b >= 32:
        b = (b // 32) * 32                          # u8 output (32,128) packing
    elif b >= 8:
        b = (b // 8) * 8                            # f32 input (8,128) packing
    else:
        # Second-minor block dim should be a multiple of 8 or the full dim.
        if total > 8 and 8 * bytes_per_img <= (20 << 20):
            b = 8
        elif total * bytes_per_img <= (20 << 20):
            b = total
        # else: keep the small b.
        # TODO(synk): intra-image row tiling (1-row halo) for planes so large
        # that even an 8-image block overflows the VMEM budget.
    return min(b, total)


@jax.jit
def boundary(m):
    """Pallas equivalent of Boundary.forward.  m: (N, 1, H, W).

    Returns the 0/1 boundary mask as uint8 (value-identical to the torch
    module's bool result; per perf review the trailing HBM cast pass is
    dropped -- callers needing bool can cast at the consumer).
    """
    N, C, H, W = m.shape
    assert C == 1, "Boundary's conv kernel is (1, 1, 3, 3); expects C == 1."
    total, HW = N * C, H * W

    x = m.reshape(total, HW)                        # free metadata reshape
    if x.dtype == jnp.bool_:
        x = x.astype(jnp.uint8)                     # avoid bool-ref lowering

    # (1, HW) border mask constant: 1 on the image border, 0 interior.
    bm = np.zeros((H, W), np.uint8)
    bm[0, :] = 1
    bm[-1, :] = 1
    bm[:, 0] = 1
    bm[:, -1] = 1
    border = jnp.asarray(bm.reshape(1, HW))

    in_itemsize = jnp.dtype(x.dtype).itemsize
    B = _pick_block_images(total, HW, in_itemsize)
    grid = (pl.cdiv(total, B),)

    bytes_per_img = HW * (in_itemsize + 1)
    vmem_needed = 2 * B * bytes_per_img + HW + (2 << 20)   # double-buffered blocks
    vmem_limit = int(min(48 << 20, max(32 << 20, vmem_needed)))

    out_u8 = pl.pallas_call(
        _make_boundary_kernel(H, W),
        out_shape=jax.ShapeDtypeStruct((total, HW), jnp.uint8),
        grid=grid,
        in_specs=[
            pl.BlockSpec((B, HW), lambda i: (i, 0)),
            pl.BlockSpec((1, HW), lambda i: (0, 0)),   # constant block -> fetched once
        ],
        out_specs=pl.BlockSpec((B, HW), lambda i: (i, 0)),
        compiler_params=pltpu.CompilerParams(
            dimension_semantics=("parallel",),
            vmem_limit_bytes=vmem_limit),
    )(x, border)

    return out_u8.reshape(N, C, H, W)


def _reference(m):
    """Pure-JAX reference matching F.conv2d semantics exactly."""
    x = m.astype(jnp.float32)
    k = jnp.array([[0.0, -1.0, 0.0],
                   [-1.0, 4.0, -1.0],
                   [0.0, -1.0, 0.0]], jnp.float32).reshape(1, 1, 3, 3)

    def conv(a):
        return jax.lax.conv_general_dilated(
            a, k, window_strides=(1, 1), padding=((1, 1), (1, 1)),
            dimension_numbers=("NCHW", "OIHW", "NCHW"))

    return jnp.logical_or(conv(x) >= 0.5, conv(1.0 - x) >= 0.5)


if __name__ == "__main__":
    key = jax.random.PRNGKey(0)
    # Boundary operates on a (near-)binary mask; exact f32 arithmetic here.
    m = (jax.random.uniform(key, (2, 1, 16, 16)) > 0.5).astype(jnp.float32)

    out = jax.block_until_ready(boundary(m))
    ref = _reference(m)

    assert out.shape == ref.shape
    assert out.dtype == jnp.uint8
    assert bool(jnp.array_equal(out.astype(jnp.bool_), ref))
    print("KERNEL_OK")
</pallas_src>

<mosaic_0001>
module attributes {stable_mosaic.version = 11 : i64} {
  func.func @kernel(%arg0: i32, %arg1: memref<2x256xf32, #tpu.memory_space<vmem>>, %arg2: memref<1x256xi8, #tpu.memory_space<vmem>>, %arg3: memref<2x256xi8, #tpu.memory_space<vmem>>) attributes {dimension_semantics = [#tpu.dimension_semantics<parallel>], iteration_bounds = array<i64: 1>, scalar_prefetch = 0 : i64, scratch_operands = 0 : i64, tpu.core_type = #tpu.core_type<tc>, window_params = [{transform_indices = @transform_0, window_bounds = array<i64: 2, 256>}, {pipeline_mode = #tpu.pipeline_mode<synchronous>, transform_indices = @transform_1, window_bounds = array<i64: 1, 256>}, {transform_indices = @transform_2, window_bounds = array<i64: 2, 256>}]} {
    %c0 = arith.constant 0 : index
    %c0_0 = arith.constant 0 : index
    %0 = vector.load %arg1[%c0, %c0_0] : memref<2x256xf32, #tpu.memory_space<vmem>>, vector<2x256xf32>
    %cst = arith.constant 4.000000e+00 : f32
    %1 = vector.broadcast %cst : f32 to vector<2x256xf32>
    %2 = arith.mulf %1, %0 : vector<2x256xf32>
    %c16_i32 = arith.constant 16 : i32
    %3 = tpu.dynamic_rotate %0 by %c16_i32 dim 1 : vector<2x256xf32>, i32 -> vector<2x256xf32>
    %4 = arith.subf %2, %3 : vector<2x256xf32>
    %c240_i32 = arith.constant 240 : i32
    %5 = tpu.dynamic_rotate %0 by %c240_i32 dim 1 : vector<2x256xf32>, i32 -> vector<2x256xf32>
    %6 = arith.subf %4, %5 : vector<2x256xf32>
    %c1_i32 = arith.constant 1 : i32
    %7 = tpu.dynamic_rotate %0 by %c1_i32 dim 1 : vector<2x256xf32>, i32 -> vector<2x256xf32>
    %8 = arith.subf %6, %7 : vector<2x256xf32>
    %c255_i32 = arith.constant 255 : i32
    %9 = tpu.dynamic_rotate %0 by %c255_i32 dim 1 : vector<2x256xf32>, i32 -> vector<2x256xf32>
    %10 = arith.subf %8, %9 : vector<2x256xf32>
    %11 = math.absf %10 : vector<2x256xf32>
    %cst_1 = arith.constant 5.000000e-01 : f32
    %12 = vector.broadcast %cst_1 : f32 to vector<2x256xf32>
    %13 = arith.cmpf oge, %11, %12 : vector<2x256xf32>
    %c0_2 = arith.constant 0 : index
    %c0_3 = arith.constant 0 : index
    %14 = vector.load %arg2[%c0_2, %c0_3] : memref<1x256xi8, #tpu.memory_space<vmem>>, vector<1x256xi8>
    %c0_i8 = arith.constant 0 : i8
    %15 = vector.broadcast %c0_i8 : i8 to vector<1x256xi8>
    %16 = arith.cmpi ne, %14, %15 : vector<1x256xi8>
    %17 = vector.broadcast %16 : vector<1x256xi1> to vector<2x256xi1>
    %18 = arith.ori %13, %17 : vector<2x256xi1>
    %19 = arith.extui %18 : vector<2x256xi1> to vector<2x256xi8>
    %c0_4 = arith.constant 0 : index
    %c0_5 = arith.constant 0 : index
    %20 = vector.load %arg3[%c0_4, %c0_5] : memref<2x256xi8, #tpu.memory_space<vmem>>, vector<2x256xi8>
    tpu.vector_store %arg3[%c0_4, %c0_5], %19 {strides = array<i32>} : memref<2x256xi8, #tpu.memory_space<vmem>>, vector<2x256xi8>,
    return
  }
  func.func @transform_0(%arg0: i32) -> (i32, i32) {
    %c0_i32 = arith.constant 0 : i32
    %c0_i32_0 = arith.constant 0 : i32
    return %arg0, %c0_i32 : i32, i32
  }
  func.func @transform_1(%arg0: i32) -> (i32, i32) {
    %c0_i32 = arith.constant 0 : i32
    %c0_i32_0 = arith.constant 0 : i32
    %c0_i32_1 = arith.constant 0 : i32
    return %c0_i32, %c0_i32_0 : i32, i32
  }
  func.func @transform_2(%arg0: i32) -> (i32, i32) {
    %c0_i32 = arith.constant 0 : i32
    %c0_i32_0 = arith.constant 0 : i32
    return %arg0, %c0_i32 : i32, i32
  }
}

</mosaic_0001>

<llo_original>
// kernel: boundary.1
$region0: #{boundary.1}
  #allocation0 [shape = 'u32[]', space=smem, size = 0x4, offset = 0x4, fixed_abs, tag = 'smem constant byte address 0x4 - core index']
  #allocation1 [shape = 'u32[144,128]{1,0:T(1,128)}', space=vmem, size = 0x12000, scoped, tag = 'internal scratch']
  %s0 = inlined_call_operand.vmem [shape: f32[2,256], index: 0, kind: input, shape index: {}]
  %s1 = inlined_call_operand.vmem [shape: u8[1,256], index: 1, kind: input, shape index: {}]
  %s2 = inlined_call_operand.vmem [shape: u8[2,256], index: 2, kind: output, shape index: {}]
  %s3 = sld [smem:[#allocation0]]
  $region18: #{boundary.1} parent=0
    _
  %s5 = ssub.s32 1, %s3
  %s6 = scalar_select 0, %s5, %s3
  // Predicated region
  $region2: #{boundary.1} parent=0 // pred_check
    _
  $region3: #{boundary.1} parent=0 // pred_check_branch
    %8 = sbr.rel (0) target = $region5
  $region4: #{boundary.1} parent=0 // pred_region
    _
  $region5: #{boundary.1} parent=0 // pred_fallthru
    _
  // Predicated region
  $region6: #{boundary.1} parent=0 // pred_check
    _
  $region7: #{boundary.1} parent=0 // pred_check_branch
    %10 = sbr.rel (0) target = $region9
  $region8: #{boundary.1} parent=0 // pred_region
    _
  $region9: #{boundary.1} parent=0 // pred_fallthru
    _
  %v13 = vld [vmem:[%s0] sm:$0xf]
  %v14 = vmul.f32 %v13, 4.0
  %v17 = vunpack.c.l.s4 1983009808
  %v18 = vunpack.c.0.s8 %v17
  %v19 = vlaneseq
  %v20 = vshrl.u32 %v19, 7
  %v21 = vsub.s32 %v18, %v20
  %v22 = vrot.slane %v13, %v21
  %v23 = vcombine.high %v22, %v22
  %26 = vrot.lane.b32.xlu0 %v22, 16
  %v27 = vpop.permute.xlu0 %26
  %28 = vrot.lane.b32.xlu0 %v23, 16
  %v29 = vpop.permute.xlu0 %28
  %v30 = vlaneseq
  %v31 = vand.u32 %v30, 127
  %vm32 = vcmp.lt.s32.totalorder %v31, 16
  %v33 = vsel %vm32, %v27, %v29
  %v34 = vsel %vm32, %v29, %v27
  %v37 = vcombine.low %v34, %v33
  %v39 = vunpack.c.l.s4 1983009808
  %v40 = vunpack.c.0.s8 %v39
  %v41 = vlaneseq
  %v42 = vshrl.u32 %v41, 7
  %v43 = vsub.s32 %v40, %v42
  %v44 = vrot.slane %v37, %v43
  %v46 = vsub.f32 %v14, %v44
  %47 = vrot.lane.b32.xlu0 %v22, 112
  %v48 = vpop.permute.xlu0 %47
  %49 = vrot.lane.b32.xlu0 %v23, 112
  %v50 = vpop.permute.xlu0 %49
  %vm51 = vcmp.lt.s32.totalorder %v31, 112
  %v52 = vsel %vm51, %v48, %v50
  %v53 = vsel %vm51, %v50, %v48
  %v56 = vcombine.low %v52, %v53
  %v58 = vunpack.c.l.s4 1983009808
  %v59 = vunpack.c.0.s8 %v58
  %v60 = vlaneseq
  %v61 = vshrl.u32 %v60, 7
  %v62 = vsub.s32 %v59, %v61
  %v63 = vrot.slane %v56, %v62
  %v65 = vsub.f32 %v46, %v63
  %66 = vrot.lane.b32.xlu0 %v22, 1
  %v67 = vpop.permute.xlu0 %66
  %68 = vrot.lane.b32.xlu0 %v23, 1
  %v69 = vpop.permute.xlu0 %68
  %vm70 = vcmp.lt.s32.totalorder %v31, 1
  %v71 = vsel %vm70, %v67, %v69
  %v72 = vsel %vm70, %v69, %v67
  %v75 = vcombine.low %v72, %v71
  %v77 = vunpack.c.l.s4 1983009808
  %v78 = vunpack.c.0.s8 %v77
  %v79 = vlaneseq
  %v80 = vshrl.u32 %v79, 7
  %v81 = vsub.s32 %v78, %v80
  %v82 = vrot.slane %v75, %v81
  %v84 = vsub.f32 %v65, %v82
  %85 = vrot.lane.b32.xlu0 %v22, 127
  %v86 = vpop.permute.xlu0 %85
  %87 = vrot.lane.b32.xlu0 %v23, 127
  %v88 = vpop.permute.xlu0 %87
  %vm89 = vcmp.lt.s32.totalorder %v31, 127
  %v90 = vsel %vm89, %v86, %v88
  %v91 = vsel %vm89, %v88, %v86
  %v94 = vcombine.low %v90, %v91
  %v96 = vunpack.c.l.s4 1983009808
  %v97 = vunpack.c.0.s8 %v96
  %v98 = vlaneseq
  %v99 = vshrl.u32 %v98, 7
  %v100 = vsub.s32 %v97, %v99
  %v101 = vrot.slane %v94, %v100
  %v103 = vsub.f32 %v84, %v101
  %v104 = vand.u32 2147483647, %v103
  %vm105 = vcmp.ge.f32.partialorder %v104, 0.5
  %v106 = vld [vmem:[%s1] sm:$0x3]
  %vm107 = vnez %v106
  %v108 = vsel %vm107, 16843009, 0
  %v109 = vunpack.c.0.s8 %v108
  %vm110 = vcmp.ne.s32.totalorder %v109, 0
  %v111 = vsel %vm110, 1, 0
  %v112 = vlaneseq
  %v113 = vshrl.u32 %v112, 7
  %v114 = vsub.s32 0, %v113
  %v115 = vrot.slane %v111, %v114
  %v116 = vlaneseq
  %v117 = vshrl.u32 %v116, 7
  %v118 = vsub.s32 4, %v117
  %v119 = vrot.slane %v111, %v118
  %vm120 = vcmp.ne.s32.totalorder %v115, 0
  %vm121 = vcmp.ne.s32.totalorder %v119, 0
  %v122 = vsel %vm120, 1, 0
  %v123 = vsel %vm121, 1, 0
  %v124 = vlaneseq
  %v125 = vshrl.u32 %v124, 7
  %v126 = vsub.s32 0, %v125
  %v127 = vrot.slane %v122, %v126
  %v128 = vlaneseq
  %v129 = vshrl.u32 %v128, 7
  %v130 = vsub.s32 0, %v129
  %v131 = vrot.slane %v123, %v130
  %vm132 = vcmp.eq.s32.totalorder %v127, 1
  %vm133 = vcmp.eq.s32.totalorder %v131, 1
  %v134 = vsel %vm132, 1, 0
  %v135 = vsel %vm133, 1, 0
  %v136 = vcombine.low %v134, %v135
  %v138 = vunpack.c.l.s4 1983009808
  %v139 = vunpack.c.0.s8 %v138
  %v140 = vlaneseq
  %v141 = vshrl.u32 %v140, 7
  %v142 = vsub.s32 %v139, %v141
  %v143 = vrot.slane %v136, %v142
  %vm144 = vcmp.ne.s32.totalorder %v143, 0
  %vm145 = vmor %vm105, %vm144
  %v146 = vsel %vm145, 1, 0
  %v148 = vunpack.c.l.s4 1983009808
  %v149 = vunpack.c.0.s8 %v148
  %v150 = vlaneseq
  %v151 = vshrl.u32 %v150, 7
  %v152 = vsub.s32 %v149, %v151
  %v153 = vrot.slane %v146, %v152
  %vm154 = vcmp.ne.s32.totalorder %v153, 0
  %v155 = vsel %vm154, 1, 0
  %v156 = vpack.c.b16 %v155, %v155
  %v157 = vpack.c.b8 %v156, %v156
  %vm158 = vnez %v157
  %v159 = vsel %vm158, 16843009, 0
  %v161 = vunpack.c.l.s4 1966171168
  %v162 = vunpack.c.0.s8 %v161
  %v163 = vlaneseq
  %v164 = vshrl.u32 %v163, 7
  %v165 = vsub.s32 %v162, %v164
  %v166 = vrot.slane %v159, %v165
  %v167 = vcombine.high %v166, %v166
  %v169 = vunpack.c.l.s4 1966171168
  %v170 = vunpack.c.0.s8 %v169
  %v171 = vlaneseq
  %v172 = vshrl.u32 %v171, 7
  %v173 = vsub.s32 %v170, %v172
  %v174 = vrot.slane %v166, %v173
  %v176 = vunpack.c.l.s4 1966171168
  %v177 = vunpack.c.0.s8 %v176
  %v178 = vlaneseq
  %v179 = vshrl.u32 %v178, 7
  %v180 = vsub.s32 %v177, %v179
  %v181 = vrot.slane %v167, %v180
  %vm182 = vnez %v174
  %vm183 = vnez %v181
  %v184 = vsel %vm182, 16843009, 0
  %v185 = vsel %vm183, 16843009, 0
  %v186 = vcombine.low %v184, %v185
  %v188 = vunpack.c.l.s4 1966171168
  %v189 = vunpack.c.0.s8 %v188
  %v190 = vlaneseq
  %v191 = vshrl.u32 %v190, 7
  %v192 = vsub.s32 %v189, %v191
  %v193 = vrot.slane %v186, %v192
  %v195 = vunpack.c.l.s4 1966171168
  %v196 = vunpack.c.0.s8 %v195
  %v197 = vlaneseq
  %v198 = vshrl.u32 %v197, 7
  %v199 = vsub.s32 %v196, %v198
  %v200 = vrot.slane %v193, %v199
  %vm201 = vcmask 1040384
  %vm202 = vsmask.f32 256
  %vm203 = vmand %vm201, %vm202
  %vm204 = vcmask 1041409
  %vm205 = vsmask.f32 1280
  %vm206 = vmand %vm204, %vm205
  %vm207 = vmor %vm206, %vm203
  %v208 = vld [vmem:[%s2] sm:$0x3]
  %v209 = vsel %vm207, %v200, %v208
  %210 = vst [vmem:[%s2] sm:$0x3] %v209
  // Predicated region
  $region10: #{boundary.1} parent=0 // pred_check
    _
  $region11: #{boundary.1} parent=0 // pred_check_branch
    %212 = sbr.rel (0) target = $region13
  $region12: #{boundary.1} parent=0 // pred_region
    _
  $region13: #{boundary.1} parent=0 // pred_fallthru
    _
  // Predicated region
  $region14: #{boundary.1} parent=0 // pred_check
    _
  $region15: #{boundary.1} parent=0 // pred_check_branch
    %214 = sbr.rel (0) target = $region17
  $region16: #{boundary.1} parent=0 // pred_region
    _
  $region17: #{boundary.1} parent=0 // pred_fallthru
    _

</llo_original>
